<compile_context>
chip_gen: v7x
topology: tpu7x:2x2x1
jax: 0.10.0
libtpu: 0.0.40
codegen_flags: <defaults>
</compile_context>

<pallas_src>
import jax
import jax.numpy as jnp
import numpy as np
from jax.experimental import pallas as pl
from jax.experimental.pallas import tpu as pltpu


def _round_up(v, m):
    return ((v + m - 1) // m) * m


def _conv_gap_kernel(p_ref, wct_ref, bc_ref, pooled_ref, acc_ref):
    """One (batch, spatial-tile) step: im2col conv + bias + ReLU, accumulated
    into a (Cp, TS) VPU accumulator.  On the last spatial step a single XLU
    lane-reduce emits the per-batch GAP *sum* (1/S is folded into the head)."""
    s = pl.program_id(1)

    @pl.when(s == 0)
    def _init():
        acc_ref[...] = jnp.zeros_like(acc_ref)

    # Single MXU matmul per step: (Cp, Kp) @ (Kp, TS) -> (Cp, TS), f32 acc.
    conv = jnp.dot(wct_ref[...], p_ref[...], preferred_element_type=jnp.float32)
    acc_ref[...] += jnp.maximum(conv + bc_ref[...], 0.0)       # bias + ReLU (VPU)

    @pl.when(s == pl.num_programs(1) - 1)
    def _finish():
        pooled_ref[...] = jnp.sum(acc_ref[...], axis=1, keepdims=True)


def _head_kernel(x_ref, w_ref, b_ref, o_ref):
    """last_linear: one batched (Np, Cp) @ (Cp, NCp) GEMM + bias."""
    o_ref[...] = jnp.dot(x_ref[...], w_ref[...],
                         preferred_element_type=jnp.float32) + b_ref[...]


def finetune_forward(x_nchw, params, *, spatial_tile=2048):
    """Pallas forward.  x_nchw: (N, Cin, H, W) float32 -> (N, num_classes)."""
    w_conv, b_conv, w_head, b_head = params
    N, Cin, H, W = x_nchw.shape
    Cout = w_conv.shape[0]
    num_classes = w_head.shape[1]

    S = H * W
    # TODO(synk): remainder/mask path for H*W not a multiple of 128.
    assert S % 128 == 0, "H*W must be a multiple of 128"
    TS = max(128, (min(S, spatial_tile) // 128) * 128)
    while S % TS:
        TS -= 128

    K = 9 * Cin
    Kp = _round_up(K, 8)                 # sublane-aligned contraction (27 -> 32)
    Cp = _round_up(Cout, 128)            # conv channels (32 -> 128)
    NCp = _round_up(num_classes, 128)    # logits lanes (10 -> 128)
    Np = _round_up(N, 8)                 # batch rows for the head GEMM

    # --- wrapper glue: pad=1, im2col, stored lane-dense as (N, Kp, S) ---
    xp = jnp.pad(x_nchw, ((0, 0), (0, 0), (1, 1), (1, 1)))
    taps = [xp[:, :, kh:kh + H, kw:kw + W] for kh in range(3) for kw in range(3)]
    patches = jnp.stack(taps, axis=1).reshape(N, K, S)      # k = (kh*3+kw)*Cin + ci
    patches = jnp.pad(patches, ((0, 0), (0, Kp - K), (0, 0))).astype(jnp.bfloat16)

    # conv weight (Cout, Cin, 3, 3) -> (Cp, Kp) matching the tap order above
    wct = jnp.transpose(w_conv, (0, 2, 3, 1)).reshape(Cout, K)
    wct = jnp.pad(wct, ((0, Cp - Cout), (0, Kp - K))).astype(jnp.bfloat16)
    bc = jnp.pad(b_conv, (0, Cp - Cout)).reshape(Cp, 1).astype(jnp.float32)

    grid = (N, S // TS)
    conv_flops = 2 * N * S * Kp * Cp
    conv_bytes = patches.size * 2 + wct.size * 2 + bc.size * 4 + N * Cp * 4

    pooled = pl.pallas_call(
        _conv_gap_kernel,
        out_shape=jax.ShapeDtypeStruct((N, Cp, 1), jnp.float32),
        grid_spec=pltpu.PrefetchScalarGridSpec(
            num_scalar_prefetch=0,
            grid=grid,
            in_specs=[
                pl.BlockSpec((None, Kp, TS), lambda b, s: (b, 0, s)),  # patches (lane-dense)
                pl.BlockSpec((Cp, Kp), lambda b, s: (0, 0)),           # conv weight^T
                pl.BlockSpec((Cp, 1), lambda b, s: (0, 0)),            # conv bias
            ],
            out_specs=pl.BlockSpec((None, Cp, 1), lambda b, s: (b, 0, 0)),
            scratch_shapes=[pltpu.VMEM((Cp, TS), jnp.float32)],        # GAP accumulator
        ),
        compiler_params=pltpu.CompilerParams(
            dimension_semantics=("parallel", "arbitrary"),
            vmem_limit_bytes=32 * 1024 * 1024),
        cost_estimate=pl.CostEstimate(
            flops=conv_flops, transcendentals=0, bytes_accessed=conv_bytes),
    )(patches, wct, bc)

    # --- last_linear head: one batched GEMM, outside the spatial loop ---
    pooled2d = pooled[:, :, 0]                                # (N, Cp) GAP sums
    pooled_p = jnp.pad(pooled2d, ((0, Np - N), (0, 0))).astype(jnp.bfloat16)
    wh = w_head * (1.0 / float(S))                            # fold 1/(H*W) into W
    wh = jnp.pad(wh, ((0, Cp - Cout), (0, NCp - num_classes))).astype(jnp.bfloat16)
    bh = jnp.pad(b_head, (0, NCp - num_classes)).reshape(1, NCp).astype(jnp.float32)

    logits = pl.pallas_call(
        _head_kernel,
        out_shape=jax.ShapeDtypeStruct((Np, NCp), jnp.float32),
        grid=(1,),
        in_specs=[
            pl.BlockSpec((Np, Cp), lambda i: (0, 0)),
            pl.BlockSpec((Cp, NCp), lambda i: (0, 0)),
            pl.BlockSpec((1, NCp), lambda i: (0, 0)),
        ],
        out_specs=pl.BlockSpec((Np, NCp), lambda i: (0, 0)),
        cost_estimate=pl.CostEstimate(
            flops=2 * Np * Cp * NCp, transcendentals=0,
            bytes_accessed=Np * Cp * 2 + Cp * NCp * 2 + NCp * 4 + Np * NCp * 4),
    )(pooled_p, wh, bh)

    return logits[:N, :num_classes]


def reference_forward(x_nchw, params):
    """Pure-JAX f32 reference matching the synthetic net's PyTorch semantics."""
    w_conv, b_conv, w_head, b_head = params
    y = jax.lax.conv_general_dilated(
        x_nchw, w_conv, window_strides=(1, 1), padding="SAME",
        dimension_numbers=("NCHW", "OIHW", "NCHW"))
    y = y + b_conv[None, :, None, None]
    y = jnp.maximum(y, 0.0)
    pooled = y.mean(axis=(2, 3))
    return pooled @ w_head + b_head


if __name__ == "__main__":
    key = jax.random.PRNGKey(0)
    N, Cin, H, W = 2, 3, 16, 16
    Cout, num_classes = 32, 10

    k = jax.random.split(key, 5)
    x = jax.random.normal(k[0], (N, Cin, H, W), jnp.float32)
    w_conv = jax.random.normal(k[1], (Cout, Cin, 3, 3), jnp.float32) * 0.1
    b_conv = jax.random.normal(k[2], (Cout,), jnp.float32) * 0.1
    # fresh params: the replaced last_linear (in_features=Cout -> num_classes)
    w_head = jax.random.normal(k[3], (Cout, num_classes), jnp.float32) * 0.1
    b_head = jax.random.normal(k[4], (num_classes,), jnp.float32) * 0.1
    params = (w_conv, b_conv, w_head, b_head)

    out = finetune_forward(x, params)
    jax.block_until_ready(out)

    ref = reference_forward(x, params)
    # bf16 MXU operands with f32 accumulation -> small drift vs. the f32 reference
    np.testing.assert_allclose(np.asarray(out), np.asarray(ref),
                               rtol=2e-2, atol=2e-2)
    print("KERNEL_OK")
</pallas_src>

<mosaic_0001>
module attributes {stable_mosaic.version = 11 : i64} {
  func.func @_conv_gap_kernel(%arg0: i32, %arg1: i32, %arg2: memref<1x32x256xbf16, #tpu.memory_space<vmem>>, %arg3: memref<128x32xbf16, #tpu.memory_space<vmem>>, %arg4: memref<128x1xf32, #tpu.memory_space<vmem>>, %arg5: memref<1x128x1xf32, #tpu.memory_space<vmem>>, %arg6: memref<128x256xf32, #tpu.memory_space<vmem>>) attributes {dimension_semantics = [#tpu.dimension_semantics<parallel>, #tpu.dimension_semantics<arbitrary>], iteration_bounds = array<i64: 2, 1>, scalar_prefetch = 0 : i64, scratch_operands = 1 : i64, tpu.core_type = #tpu.core_type<tc>, window_params = [{transform_indices = @transform_0, window_bounds = array<i64: 1, 32, 256>}, {pipeline_mode = #tpu.pipeline_mode<synchronous>, transform_indices = @transform_1, window_bounds = array<i64: 128, 32>}, {pipeline_mode = #tpu.pipeline_mode<synchronous>, transform_indices = @transform_2, window_bounds = array<i64: 128, 1>}, {transform_indices = @transform_3, window_bounds = array<i64: 1, 128, 1>}]} {
    %c0_i32 = arith.constant 0 : i32
    %0 = arith.cmpi eq, %arg1, %c0_i32 : i32
    %1 = arith.extui %0 : i1 to i32
    %c0_i32_0 = arith.constant 0 : i32
    %2 = arith.cmpi ne, %1, %c0_i32_0 : i32
    scf.if %2 {
      %cst_14 = arith.constant 0.000000e+00 : f32
      %18 = vector.broadcast %cst_14 : f32 to vector<128x256xf32>
      %c0_15 = arith.constant 0 : index
      %c0_16 = arith.constant 0 : index
      %19 = vector.load %arg6[%c0_15, %c0_16] : memref<128x256xf32, #tpu.memory_space<vmem>>, vector<128x256xf32>
      tpu.vector_store %arg6[%c0_15, %c0_16], %18 {strides = array<i32>} : memref<128x256xf32, #tpu.memory_space<vmem>>, vector<128x256xf32>,
    } else {
    }
    %c0 = arith.constant 0 : index
    %c0_1 = arith.constant 0 : index
    %3 = vector.load %arg3[%c0, %c0_1] : memref<128x32xbf16, #tpu.memory_space<vmem>>, vector<128x32xbf16>
    %c0_2 = arith.constant 0 : index
    %c0_3 = arith.constant 0 : index
    %c0_4 = arith.constant 0 : index
    %4 = vector.load %arg2[%c0_2, %c0_3, %c0_4] : memref<1x32x256xbf16, #tpu.memory_space<vmem>>, vector<1x32x256xbf16>
    %5 = vector.shape_cast %4 : vector<1x32x256xbf16> to vector<32x256xbf16>
    %cst = arith.constant dense<0.000000e+00> : vector<128x256xf32>
    %6 = tpu.matmul %3, %5, %cst {dimension_numbers = #tpu.dot_dimension_numbers<[1], [0], [0], [1], [0, 0, 1, 1], [], []>} : vector<128x32xbf16>, vector<32x256xbf16>, vector<128x256xf32> -> vector<128x256xf32>
    %c0_5 = arith.constant 0 : index
    %c0_6 = arith.constant 0 : index
    %7 = vector.load %arg6[%c0_5, %c0_6] : memref<128x256xf32, #tpu.memory_space<vmem>>, vector<128x256xf32>
    %c0_7 = arith.constant 0 : index
    %c0_8 = arith.constant 0 : index
    %8 = vector.load %arg4[%c0_7, %c0_8] : memref<128x1xf32, #tpu.memory_space<vmem>>, vector<128x1xf32>
    %9 = vector.broadcast %8 : vector<128x1xf32> to vector<128x256xf32>
    %10 = arith.addf %6, %9 : vector<128x256xf32>
    %cst_9 = arith.constant 0.000000e+00 : f32
    %11 = vector.broadcast %cst_9 : f32 to vector<128x256xf32>
    %12 = arith.maximumf %10, %11 : vector<128x256xf32>
    %13 = arith.addf %7, %12 : vector<128x256xf32>
    %c0_10 = arith.constant 0 : index
    %c0_11 = arith.constant 0 : index
    %14 = vector.load %arg6[%c0_10, %c0_11] : memref<128x256xf32, #tpu.memory_space<vmem>>, vector<128x256xf32>
    tpu.vector_store %arg6[%c0_10, %c0_11], %13 {strides = array<i32>} : memref<128x256xf32, #tpu.memory_space<vmem>>, vector<128x256xf32>,
    %c0_i32_12 = arith.constant 0 : i32
    %15 = arith.cmpi eq, %arg1, %c0_i32_12 : i32
    %16 = arith.extui %15 : i1 to i32
    %c0_i32_13 = arith.constant 0 : i32
    %17 = arith.cmpi ne, %16, %c0_i32_13 : i32
    scf.if %17 {
      %c0_14 = arith.constant 0 : index
      %c0_15 = arith.constant 0 : index
      %18 = vector.load %arg6[%c0_14, %c0_15] : memref<128x256xf32, #tpu.memory_space<vmem>>, vector<128x256xf32>
      %cst_16 = arith.constant dense<0.000000e+00> : vector<128xf32>
      %19 = vector.multi_reduction <add>, %18, %cst_16 [1] : vector<128x256xf32> to vector<128xf32>
      %20 = vector.shape_cast %19 : vector<128xf32> to vector<128x1xf32>
      %c0_17 = arith.constant 0 : index
      %c0_18 = arith.constant 0 : index
      %c0_19 = arith.constant 0 : index
      %21 = vector.load %arg5[%c0_17, %c0_18, %c0_19] : memref<1x128x1xf32, #tpu.memory_space<vmem>>, vector<1x128x1xf32>
      %22 = vector.shape_cast %21 : vector<1x128x1xf32> to vector<128x1xf32>
      %23 = vector.shape_cast %20 : vector<128x1xf32> to vector<1x128x1xf32>
      tpu.vector_store %arg5[%c0_17, %c0_18, %c0_19], %23 {strides = array<i32>} : memref<1x128x1xf32, #tpu.memory_space<vmem>>, vector<1x128x1xf32>,
    } else {
    }
    return
  }
  func.func @transform_0(%arg0: i32, %arg1: i32) -> (i32, i32, i32) {
    %c0_i32 = arith.constant 0 : i32
    %c0_i32_0 = arith.constant 0 : i32
    return %arg0, %c0_i32, %arg1 : i32, i32, i32
  }
  func.func @transform_1(%arg0: i32, %arg1: i32) -> (i32, i32) {
    %c0_i32 = arith.constant 0 : i32
    %c0_i32_0 = arith.constant 0 : i32
    %c0_i32_1 = arith.constant 0 : i32
    return %c0_i32, %c0_i32_0 : i32, i32
  }
  func.func @transform_2(%arg0: i32, %arg1: i32) -> (i32, i32) {
    %c0_i32 = arith.constant 0 : i32
    %c0_i32_0 = arith.constant 0 : i32
    %c0_i32_1 = arith.constant 0 : i32
    return %c0_i32, %c0_i32_0 : i32, i32
  }
  func.func @transform_3(%arg0: i32, %arg1: i32) -> (i32, i32, i32) {
    %c0_i32 = arith.constant 0 : i32
    %c0_i32_0 = arith.constant 0 : i32
    %c0_i32_1 = arith.constant 0 : i32
    return %arg0, %c0_i32, %c0_i32_0 : i32, i32, i32
  }
}

</mosaic_0001>

<llo_original>
// kernel: tpu_custom_call.1
$region0: #{tpu_custom_call.1}
  #allocation0 [shape = 'u32[]', space=smem, size = 0x4, offset = 0x4, fixed_abs, tag = 'smem constant byte address 0x4 - core index']
  #allocation1 [shape = 'u32[144,128]{1,0:T(1,128)}', space=vmem, size = 0x12000, scoped, tag = 'internal scratch']
  #allocation2 [shape = 'f32[128,256]{1,0:T(8,128)}', space=vmem, size = 0x20000, scoped, tag = 'scratch operand']
  %s0 = inlined_call_operand.vmem [shape: bf16[2,32,256], index: 0, kind: input, shape index: {}]
  %s1 = inlined_call_operand.vmem [shape: bf16[128,32], index: 1, kind: input, shape index: {}]
  %s2 = inlined_call_operand.vmem [shape: f32[128,1], index: 2, kind: input, shape index: {}]
  %s3 = inlined_call_operand.vmem [shape: f32[2,128,1], index: 3, kind: output, shape index: {}]
  %s4 = sld [smem:[#allocation0]]
  $region53: #{tpu_custom_call.1} parent=0
    _
  %s6 = ssub.s32 1, %s4
  %s7 = scalar_select 0, %s6, %s4
  loop: start=0, step=1, limit=4
  $region2: #{tpu_custom_call.1} parent=0 // loop_pre_header
    _
  $region3: #{tpu_custom_call.1} parent=0 // loop_header
    %s9 = sphi 0, %s13
    %p10 = scmp.ge.s32.totalorder %s9, 4
    %s16 = sphi 0, %s28
    %s17 = sphi 0, %s24
    %s18 = sphi 0, %s16
    %s19 = sphi 0, %s17
    %s20 = sphi 0, %s18
    %s21 = sphi 0, %s19
    %s33 = sphi 0, %s35
    %s36 = sphi 0, %s33
    %s37 = sphi 0, %s36
    %s53 = sphi 0, %s37
    %s57 = sphi 0, %s57
    %s59 = sphi 0, %s57
    %s60 = sphi 0, %s59
    %s74 = sphi 0, %s60
    %s78 = sphi 0, %s78
    %s80 = sphi 0, %s78
    %s81 = sphi 0, %s80
    %s95 = sphi 0, %s81
    %s101 = sphi 0, %s103
    %s104 = sphi 0, %s101
    %s105 = sphi 0, %s104
    %s121 = sphi 0, %s105
  $region4: #{tpu_custom_call.1} parent=0 // loop_header_branch
    %12 = sbr.rel (%p10) target = $region8
  $region5: #{tpu_custom_call.1} parent=0 // loop_body
    %s14 = ssub.s32 %s9, 1
    %s15 = ssub.s32 %s9, 2
    %s22 = sadd.s32 1, %s17
    %p23 = scmp.ge.s32.totalorder %s22, 1
    %s24 = scalar_select %p23, 0, %s22
    %s25 = sadd.s32 1, %s16
    %s26 = scalar_select %p23, %s25, %s16
    %p27 = scmp.ge.s32.totalorder %s26, 2
    %s28 = scalar_select %p27, 0, %s26
    %s29 = ssub.s32 %s16, %s28
    %s30 = ssub.s32 %s17, %s24
    %s31 = sor.u32 %s29, %s30
    %p32 = scmp.eq.s32.totalorder %s31, 0
    %s34 = sadd.s32 %s33, 1
    %s35 = scalar_select %p32, %s33, %s34
    %p38 = pneg %p32
    %p39 = scmp.eq.s32.totalorder %s9, 1
    %p40 = por %p38, %p39
    %p41 = scmp.ne.s32.totalorder %s33, %s36
    %p42 = scmp.eq.s32.totalorder %s9, 0
    %p43 = por %p41, %p42
    %p44 = scmp.ne.s32.totalorder %s33, %s36
    %p45 = scmp.eq.s32.totalorder %s14, 1
    %p46 = por %p44, %p45
    %p47 = scmp.ne.s32.totalorder %s36, %s37
    %p48 = scmp.eq.s32.totalorder %s14, 0
    %p49 = por %p47, %p48
    %p50 = scmp.ne.s32.totalorder %s36, %s37
    %p51 = scmp.eq.s32.totalorder %s15, 1
    %p52 = por %p50, %p51
    %p54 = scmp.ne.s32.totalorder %s37, %s53
    %p55 = scmp.eq.s32.totalorder %s15, 0
    %p56 = por %p54, %p55
    %s58 = sadd.s32 %s57, 1
    %p61 = scmp.eq.s32.totalorder %s9, 1
    %p62 = scmp.ne.s32.totalorder %s57, %s59
    %p63 = scmp.eq.s32.totalorder %s9, 0
    %p64 = por %p62, %p63
    %p65 = scmp.ne.s32.totalorder %s57, %s59
    %p66 = scmp.eq.s32.totalorder %s14, 1
    %p67 = por %p65, %p66
    %p68 = scmp.ne.s32.totalorder %s59, %s60
    %p69 = scmp.eq.s32.totalorder %s14, 0
    %p70 = por %p68, %p69
    %p71 = scmp.ne.s32.totalorder %s59, %s60
    %p72 = scmp.eq.s32.totalorder %s15, 1
    %p73 = por %p71, %p72
    %p75 = scmp.ne.s32.totalorder %s60, %s74
    %p76 = scmp.eq.s32.totalorder %s15, 0
    %p77 = por %p75, %p76
    %s79 = sadd.s32 %s78, 1
    %p82 = scmp.eq.s32.totalorder %s9, 1
    %p83 = scmp.ne.s32.totalorder %s78, %s80
    %p84 = scmp.eq.s32.totalorder %s9, 0
    %p85 = por %p83, %p84
    %p86 = scmp.ne.s32.totalorder %s78, %s80
    %p87 = scmp.eq.s32.totalorder %s14, 1
    %p88 = por %p86, %p87
    %p89 = scmp.ne.s32.totalorder %s80, %s81
    %p90 = scmp.eq.s32.totalorder %s14, 0
    %p91 = por %p89, %p90
    %p92 = scmp.ne.s32.totalorder %s80, %s81
    %p93 = scmp.eq.s32.totalorder %s15, 1
    %p94 = por %p92, %p93
    %p96 = scmp.ne.s32.totalorder %s81, %s95
    %p97 = scmp.eq.s32.totalorder %s15, 0
    %p98 = por %p96, %p97
    %s99 = ssub.s32 %s16, %s28
    %p100 = scmp.eq.s32.totalorder %s99, 0
    %s102 = sadd.s32 %s101, 1
    %s103 = scalar_select %p100, %s101, %s102
    %p106 = pneg %p100
    %p107 = scmp.eq.s32.totalorder %s9, 1
    %p108 = por %p106, %p107
    %p109 = scmp.ne.s32.totalorder %s101, %s104
    %p110 = scmp.eq.s32.totalorder %s9, 0
    %p111 = por %p109, %p110
    %p112 = scmp.ne.s32.totalorder %s101, %s104
    %p113 = scmp.eq.s32.totalorder %s14, 1
    %p114 = por %p112, %p113
    %p115 = scmp.ne.s32.totalorder %s104, %s105
    %p116 = scmp.eq.s32.totalorder %s14, 0
    %p117 = por %p115, %p116
    %p118 = scmp.ne.s32.totalorder %s104, %s105
    %p119 = scmp.eq.s32.totalorder %s15, 1
    %p120 = por %p118, %p119
    %p122 = scmp.ne.s32.totalorder %s105, %s121
    %p123 = scmp.eq.s32.totalorder %s15, 0
    %p124 = por %p122, %p123
    %p125 = scmp.le.s32.totalorder 1, %s9
    %p126 = scmp.lt.s32.totalorder %s9, 3
    %p127 = pnand %p125, %p126
    %p128 = pneg %p127
    // Predicated region
    $region9: #{tpu_custom_call.1} parent=5 // pred_check
      _
    $region10: #{tpu_custom_call.1} parent=5 // pred_check_branch
      %130 = sbr.rel (%p127) target = $region12
    $region11: #{tpu_custom_call.1} parent=5 // pred_region
      %s131 = ssub.s32 %s9, 1
      // Predicated region
      $region13: #{tpu_custom_call.1} parent=11 // pred_check
        %p132 = pneg %p70
      $region14: #{tpu_custom_call.1} parent=11 // pred_check_branch
        %134 = sbr.rel (%p132) target = $region16
      $region15: #{tpu_custom_call.1} parent=11 // pred_region
        _
      $region16: #{tpu_custom_call.1} parent=11 // pred_fallthru
        _
      // Predicated region
      $region17: #{tpu_custom_call.1} parent=11 // pred_check
        %p135 = pneg %p91
      $region18: #{tpu_custom_call.1} parent=11 // pred_check_branch
        %137 = sbr.rel (%p135) target = $region20
      $region19: #{tpu_custom_call.1} parent=11 // pred_region
        _
      $region20: #{tpu_custom_call.1} parent=11 // pred_fallthru
        _
    $region12: #{tpu_custom_call.1} parent=5 // pred_fallthru
      _
    %p138 = scmp.lt.s32.totalorder %s9, 2
    // Predicated region
    $region21: #{tpu_custom_call.1} parent=5 // pred_check
      %p139 = pneg %p138
    $region22: #{tpu_custom_call.1} parent=5 // pred_check_branch
      %141 = sbr.rel (%p139) target = $region24
    $region23: #{tpu_custom_call.1} parent=5 // pred_region
      // Predicated region
      $region25: #{tpu_custom_call.1} parent=23 // pred_check
        %p142 = pneg %p43
      $region26: #{tpu_custom_call.1} parent=23 // pred_check_branch
        %144 = sbr.rel (%p142) target = $region28
      $region27: #{tpu_custom_call.1} parent=23 // pred_region
        %s145 = smul.u32 2, %s17
        %p146 = scmp.lt.s32.totalorder %s16, 1
        %s147 = scalar_select %p146, %s16, 1
        %p148 = scmp.lt.s32.totalorder %s145, 1
        %s149 = scalar_select %p148, %s145, 1
        %s150 = smul.addr %s147, 8
        %s151 = sadd.s32 %s149, %s150
        %s152 = smul.addr %s151, 4
        %s153 = scalar_lea.vmem %s0, %s152
        %s154 = smul.u32 2, %s17
      $region28: #{tpu_custom_call.1} parent=23 // pred_fallthru
        _
    $region24: #{tpu_custom_call.1} parent=5 // pred_fallthru
      _
    %p155 = scmp.le.s32.totalorder 1, %s9
    %p156 = scmp.lt.s32.totalorder %s9, 3
    %p157 = pnand %p155, %p156
    %p158 = pneg %p157
    // Predicated region
    $region29: #{tpu_custom_call.1} parent=5 // pred_check
      _
    $region30: #{tpu_custom_call.1} parent=5 // pred_check_branch
      %160 = sbr.rel (%p157) target = $region32
    $region31: #{tpu_custom_call.1} parent=5 // pred_region
      %s161 = ssub.s32 %s9, 1
      %s162 = smul.u32 2, %s19
      %p163 = scmp.lt.s32.totalorder %s18, 1
      %s164 = scalar_select %p163, %s18, 1
      %p165 = scmp.lt.s32.totalorder %s162, 1
      %s166 = scalar_select %p165, %s162, 1
      %s167 = smul.addr %s164, 8
      %s168 = sadd.s32 %s166, %s167
      %s169 = smul.addr %s168, 4
      %s170 = scalar_lea.vmem %s0, %s169
      %p171 = pneg %p49
      %p172 = pneg %p46
      %p173 = pneg %p70
      %p174 = pneg %p67
      %p175 = pneg %p91
      %p176 = pneg %p88
      %p177 = pneg %p117
      %p178 = pneg %p114
      %p179 = scmp.lt.s32.totalorder %s18, 1
      %s180 = scalar_select %p179, %s18, 1
      %s181 = smul.addr %s180, 16
      %s182 = smul.addr %s181, 8
      %s183 = scalar_lea.vmem %s3, %s182
      %s184 = smul.u32 2, %s19
      %p185 = scmp.lt.s32.totalorder %s18, 1
      %s186 = scalar_select %p185, %s18, 1
      %p187 = scmp.lt.s32.totalorder %s184, 1
      %s188 = scalar_select %p187, %s184, 1
      %s189 = smul.addr %s186, 8
      %s190 = sadd.s32 %s188, %s189
      %s191 = smul.addr %s190, 4
      %s192 = scalar_lea.vmem %s0, %s191
      %s193 = smul.u32 2, %s19
      %p194 = scmp.lt.s32.totalorder %s18, 1
      %s195 = scalar_select %p194, %s18, 1
      %s196 = smul.addr %s195, 16
      %s197 = smul.addr %s196, 8
      %s198 = scalar_lea.vmem %s3, %s197
      %p200 = scmp.eq.s32.totalorder %s19, 0
      // Predicated region
      $region33: #{tpu_custom_call.1} parent=31 // pred_check
        %p201 = pneg %p200
      $region34: #{tpu_custom_call.1} parent=31 // pred_check_branch
        %203 = sbr.rel (%p201) target = $region36
      $region35: #{tpu_custom_call.1} parent=31 // pred_region
        %204 = vst [vmem:[#allocation2] sm:$0xff] 0.0
        %205 = vst [vmem:[#allocation2 + $0x8] sm:$0xff] 0.0
        %206 = vst [vmem:[#allocation2 + $0x10] sm:$0xff] 0.0
        %207 = vst [vmem:[#allocation2 + $0x18] sm:$0xff] 0.0
        %208 = vst [vmem:[#allocation2 + $0x20] sm:$0xff] 0.0
        %209 = vst [vmem:[#allocation2 + $0x28] sm:$0xff] 0.0
        %210 = vst [vmem:[#allocation2 + $0x30] sm:$0xff] 0.0
        %211 = vst [vmem:[#allocation2 + $0x38] sm:$0xff] 0.0
        %212 = vst [vmem:[#allocation2 + $0x40] sm:$0xff] 0.0
        %213 = vst [vmem:[#allocation2 + $0x48] sm:$0xff] 0.0
        %214 = vst [vmem:[#allocation2 + $0x50] sm:$0xff] 0.0
        %215 = vst [vmem:[#allocation2 + $0x58] sm:$0xff] 0.0
        %216 = vst [vmem:[#allocation2 + $0x60] sm:$0xff] 0.0
        %217 = vst [vmem:[#allocation2 + $0x68] sm:$0xff] 0.0
        %218 = vst [vmem:[#allocation2 + $0x70] sm:$0xff] 0.0
        %219 = vst [vmem:[#allocation2 + $0x78] sm:$0xff] 0.0
        %220 = vst [vmem:[#allocation2 + $0x80] sm:$0xff] 0.0
        %221 = vst [vmem:[#allocation2 + $0x88] sm:$0xff] 0.0
        %222 = vst [vmem:[#allocation2 + $0x90] sm:$0xff] 0.0
        %223 = vst [vmem:[#allocation2 + $0x98] sm:$0xff] 0.0
        %224 = vst [vmem:[#allocation2 + $0xa0] sm:$0xff] 0.0
        %225 = vst [vmem:[#allocation2 + $0xa8] sm:$0xff] 0.0
        %226 = vst [vmem:[#allocation2 + $0xb0] sm:$0xff] 0.0
        %227 = vst [vmem:[#allocation2 + $0xb8] sm:$0xff] 0.0
        %228 = vst [vmem:[#allocation2 + $0xc0] sm:$0xff] 0.0
        %229 = vst [vmem:[#allocation2 + $0xc8] sm:$0xff] 0.0
        %230 = vst [vmem:[#allocation2 + $0xd0] sm:$0xff] 0.0
        %231 = vst [vmem:[#allocation2 + $0xd8] sm:$0xff] 0.0
        %232 = vst [vmem:[#allocation2 + $0xe0] sm:$0xff] 0.0
        %233 = vst [vmem:[#allocation2 + $0xe8] sm:$0xff] 0.0
        %234 = vst [vmem:[#allocation2 + $0xf0] sm:$0xff] 0.0
        %235 = vst [vmem:[#allocation2 + $0xf8] sm:$0xff] 0.0
      $region36: #{tpu_custom_call.1} parent=31 // pred_fallthru
        _
      %v236 = vld [vmem:[%s1] sm:$0xf]
      %v237 = vld [vmem:[%s1 + $0x4] sm:$0xf]
      %v238 = vld [vmem:[%s1 + $0x8] sm:$0xf]
      %v239 = vld [vmem:[%s1 + $0xc] sm:$0xf]
      %v240 = vld [vmem:[%s1 + $0x10] sm:$0xf]
      %v241 = vld [vmem:[%s1 + $0x14] sm:$0xf]
      %v242 = vld [vmem:[%s1 + $0x18] sm:$0xf]
      %v243 = vld [vmem:[%s1 + $0x1c] sm:$0xf]
      %v244 = vld [vmem:[%s1 + $0x20] sm:$0xf]
      %v245 = vld [vmem:[%s1 + $0x24] sm:$0xf]
      %v246 = vld [vmem:[%s1 + $0x28] sm:$0xf]
      %v247 = vld [vmem:[%s1 + $0x2c] sm:$0xf]
      %v248 = vld [vmem:[%s1 + $0x30] sm:$0xf]
      %v249 = vld [vmem:[%s1 + $0x34] sm:$0xf]
      %v250 = vld [vmem:[%s1 + $0x38] sm:$0xf]
      %v251 = vld [vmem:[%s1 + $0x3c] sm:$0xf]
      %v252 = vld [vmem:[%s192] sm:$0xff]
      %v253 = vld [vmem:[%s192 + $0x8] sm:$0xff]
      %v254 = vld [vmem:[%s192 + $0x10] sm:$0xff]
      %v255 = vld [vmem:[%s192 + $0x18] sm:$0xff]
      %v256 = vld [vmem:[#allocation2] sm:$0xff]
      %v257 = vld [vmem:[#allocation2 + $0x8] sm:$0xff]
      %v258 = vld [vmem:[#allocation2 + $0x10] sm:$0xff]
      %v259 = vld [vmem:[#allocation2 + $0x18] sm:$0xff]
      %v260 = vld [vmem:[#allocation2 + $0x20] sm:$0xff]
      %v261 = vld [vmem:[#allocation2 + $0x28] sm:$0xff]
      %v262 = vld [vmem:[#allocation2 + $0x30] sm:$0xff]
      %v263 = vld [vmem:[#allocation2 + $0x38] sm:$0xff]
      %v264 = vld [vmem:[#allocation2 + $0x40] sm:$0xff]
      %v265 = vld [vmem:[#allocation2 + $0x48] sm:$0xff]
      %v266 = vld [vmem:[#allocation2 + $0x50] sm:$0xff]
      %v267 = vld [vmem:[#allocation2 + $0x58] sm:$0xff]
      %v268 = vld [vmem:[#allocation2 + $0x60] sm:$0xff]
      %v269 = vld [vmem:[#allocation2 + $0x68] sm:$0xff]
      %v270 = vld [vmem:[#allocation2 + $0x70] sm:$0xff]
      %v271 = vld [vmem:[#allocation2 + $0x78] sm:$0xff]
      %v272 = vld [vmem:[#allocation2 + $0x80] sm:$0xff]
      %v273 = vld [vmem:[#allocation2 + $0x88] sm:$0xff]
      %v274 = vld [vmem:[#allocation2 + $0x90] sm:$0xff]
      %v275 = vld [vmem:[#allocation2 + $0x98] sm:$0xff]
      %v276 = vld [vmem:[#allocation2 + $0xa0] sm:$0xff]
      %v277 = vld [vmem:[#allocation2 + $0xa8] sm:$0xff]
      %v278 = vld [vmem:[#allocation2 + $0xb0] sm:$0xff]
      %v279 = vld [vmem:[#allocation2 + $0xb8] sm:$0xff]
      %v280 = vld [vmem:[#allocation2 + $0xc0] sm:$0xff]
      %v281 = vld [vmem:[#allocation2 + $0xc8] sm:$0xff]
      %v282 = vld [vmem:[#allocation2 + $0xd0] sm:$0xff]
      %v283 = vld [vmem:[#allocation2 + $0xd8] sm:$0xff]
      %v284 = vld [vmem:[#allocation2 + $0xe0] sm:$0xff]
      %v285 = vld [vmem:[#allocation2 + $0xe8] sm:$0xff]
      %v286 = vld [vmem:[#allocation2 + $0xf0] sm:$0xff]
      %v287 = vld [vmem:[#allocation2 + $0xf8] sm:$0xff]
      %v288 = vld [vmem:[%s2] sm:$0xff]
      %v289 = vld [vmem:[%s2 + $0x8] sm:$0xff]
      %v290 = vld [vmem:[%s2 + $0x10] sm:$0xff]
      %v291 = vld [vmem:[%s2 + $0x18] sm:$0xff]
      %v292 = vld [vmem:[%s2 + $0x20] sm:$0xff]
      %v293 = vld [vmem:[%s2 + $0x28] sm:$0xff]
      %v294 = vld [vmem:[%s2 + $0x30] sm:$0xff]
      %v295 = vld [vmem:[%s2 + $0x38] sm:$0xff]
      %v296 = vld [vmem:[%s2 + $0x40] sm:$0xff]
      %v297 = vld [vmem:[%s2 + $0x48] sm:$0xff]
      %v298 = vld [vmem:[%s2 + $0x50] sm:$0xff]
      %v299 = vld [vmem:[%s2 + $0x58] sm:$0xff]
      %v300 = vld [vmem:[%s2 + $0x60] sm:$0xff]
      %v301 = vld [vmem:[%s2 + $0x68] sm:$0xff]
      %v302 = vld [vmem:[%s2 + $0x70] sm:$0xff]
      %v303 = vld [vmem:[%s2 + $0x78] sm:$0xff]
      %305 = vset.pattern.permute.xlu0 0
      %306 = vperm.xlu0 %305, %v288
      %v307 = vpop.permute.xlu0 %306
      %310 = vset.pattern.permute.xlu0 0
      %311 = vperm.xlu0 %310, %v289
      %v312 = vpop.permute.xlu0 %311
      %315 = vset.pattern.permute.xlu0 0
      %316 = vperm.xlu0 %315, %v290
      %v317 = vpop.permute.xlu0 %316
      %320 = vset.pattern.permute.xlu0 0
      %321 = vperm.xlu0 %320, %v291
      %v322 = vpop.permute.xlu0 %321
      %325 = vset.pattern.permute.xlu0 0
      %326 = vperm.xlu0 %325, %v292
      %v327 = vpop.permute.xlu0 %326
      %330 = vset.pattern.permute.xlu0 0
      %331 = vperm.xlu0 %330, %v293
      %v332 = vpop.permute.xlu0 %331
      %335 = vset.pattern.permute.xlu0 0
      %336 = vperm.xlu0 %335, %v294
      %v337 = vpop.permute.xlu0 %336
      %340 = vset.pattern.permute.xlu0 0
      %341 = vperm.xlu0 %340, %v295
      %v342 = vpop.permute.xlu0 %341
      %345 = vset.pattern.permute.xlu0 0
      %346 = vperm.xlu0 %345, %v296
      %v347 = vpop.permute.xlu0 %346
      %350 = vset.pattern.permute.xlu0 0
      %351 = vperm.xlu0 %350, %v297
      %v352 = vpop.permute.xlu0 %351
      %355 = vset.pattern.permute.xlu0 0
      %356 = vperm.xlu0 %355, %v298
      %v357 = vpop.permute.xlu0 %356
      %360 = vset.pattern.permute.xlu0 0
      %361 = vperm.xlu0 %360, %v299
      %v362 = vpop.permute.xlu0 %361
      %365 = vset.pattern.permute.xlu0 0
      %366 = vperm.xlu0 %365, %v300
      %v367 = vpop.permute.xlu0 %366
      %370 = vset.pattern.permute.xlu0 0
      %371 = vperm.xlu0 %370, %v301
      %v372 = vpop.permute.xlu0 %371
      %375 = vset.pattern.permute.xlu0 0
      %376 = vperm.xlu0 %375, %v302
      %v377 = vpop.permute.xlu0 %376
      %380 = vset.pattern.permute.xlu0 0
      %381 = vperm.xlu0 %380, %v303
      %v382 = vpop.permute.xlu0 %381
      %v400 = vunpack.c.l.b16 %v236
      %v401 = vunpack.c.l.b16 %v237
      %v402 = vunpack.c.l.b16 %v238
      %v403 = vunpack.c.l.b16 %v239
      %v404 = vunpack.c.l.b16 %v240
      %v405 = vunpack.c.l.b16 %v241
      %v406 = vunpack.c.l.b16 %v242
      %v407 = vunpack.c.l.b16 %v243
      %v408 = vunpack.c.l.b16 %v244
      %v409 = vunpack.c.l.b16 %v245
      %v410 = vunpack.c.l.b16 %v246
      %v411 = vunpack.c.l.b16 %v247
      %v412 = vunpack.c.l.b16 %v248
      %v413 = vunpack.c.l.b16 %v249
      %v414 = vunpack.c.l.b16 %v250
      %v415 = vunpack.c.l.b16 %v251
      %v416 = vpack.c.b16 %v401, %v400
      %v417 = vpack.c.b16 %v403, %v402
      %v418 = vpack.c.b16 %v405, %v404
      %v419 = vpack.c.b16 %v407, %v406
      %v420 = vpack.c.b16 %v409, %v408
      %v421 = vpack.c.b16 %v411, %v410
      %v422 = vpack.c.b16 %v413, %v412
      %v423 = vpack.c.b16 %v415, %v414
      %v428 = vunpack.c.l.b16 %v252
      %v429 = vunpack.c.h.b16 %v252
      %v430 = vunpack.c.l.b16 %v253
      %v431 = vunpack.c.h.b16 %v253
      %v432 = vunpack.c.l.b16 %v254
      %v433 = vunpack.c.h.b16 %v254
      %v434 = vunpack.c.l.b16 %v255
      %v435 = vunpack.c.h.b16 %v255
      %v436 = vpack.c.b16 %v430, %v428
      %v437 = vpack.c.b16 %v431, %v429
      %v438 = vpack.c.b16 %v434, %v432
      %v439 = vpack.c.b16 %v435, %v433
      %vm444 = vcmask 261120
      %v446 = vsel %vm444, %v416, 0
      %v449 = vsel %vm444, %v417, 0
      %v452 = vsel %vm444, %v418, 0
      %v455 = vsel %vm444, %v419, 0
      %v458 = vsel %vm444, %v420, 0
      %v461 = vsel %vm444, %v421, 0
      %v464 = vsel %vm444, %v422, 0
      %v467 = vsel %vm444, %v423, 0
      %469 = vmatprep.subr.bf16.mxu0 %v437
      %470 = vmatpush1.bf16.msra.mxu0 %v436
      %471 = vmatprep.subr.bf16.mxu0 %v439
      %472 = vmatpush1.bf16.msra.mxu0 %v438
      %473 = vmatprep.subr.bf16.mxu0 0
      %474 = vmatpush1.bf16.msra.mxu0 0
      %475 = vmatprep.subr.bf16.mxu0 0
      %476 = vmatpush1.bf16.msra.mxu0 0
      %477 = vmatprep.subr.bf16.mxu0 0
      %478 = vmatpush1.bf16.msra.mxu0 0
      %479 = vmatprep.subr.bf16.mxu0 0
      %480 = vmatpush1.bf16.msra.mxu0 0
      %481 = vmatprep.subr.bf16.mxu0 0
      %482 = vmatpush1.bf16.msra.mxu0 0
      %483 = vmatprep.subr.bf16.mxu0 0
      %484 = vmatpush1.bf16.msra.mxu0 0
      %485 = vmatprep.subr.bf16.mxu0 0
      %486 = vmatpush1.bf16.msra.mxu0 0
      %487 = vmatprep.subr.bf16.mxu0 0
      %488 = vmatpush1.bf16.msra.mxu0 0
      %489 = vmatprep.subr.bf16.mxu0 0
      %490 = vmatpush1.bf16.msra.mxu0 0
      %491 = vmatprep.subr.bf16.mxu0 0
      %492 = vmatpush1.bf16.msra.mxu0 0
      %493 = vmatprep.subr.bf16.mxu0 0
      %494 = vmatpush1.bf16.msra.mxu0 0
      %495 = vmatprep.subr.bf16.mxu0 0
      %496 = vmatpush1.bf16.msra.mxu0 0
      %497 = vmatprep.subr.bf16.mxu0 0
      %498 = vmatpush1.bf16.msra.mxu0 0
      %499 = vmatprep.subr.bf16.mxu0 0
      %500 = vmatpush1.bf16.msra.mxu0 0
      %501 = vmatprep.mubr.bf16.mxu0 0
      %502 = vmatmul.mubr.bf16.gmra.mrb[0].mxu0 %v446
      %v503 = vpop.f32.mrb[0].mxu0
      %v504 = vadd.f32 %v307, %v503
      %v505 = vpop.f32.mrb[0].mxu0
      %v506 = vadd.f32 %v307, %v505
      %v507 = vpop.f32.mrb[0].mxu0
      %v508 = vadd.f32 %v312, %v507
      %v509 = vpop.f32.mrb[0].mxu0
      %v510 = vadd.f32 %v312, %v509
      %511 = vmatprep.mubr.bf16.mxu0 0
      %512 = vmatmul.mubr.bf16.gmra.mrb[0].mxu0 %v449
      %v513 = vpop.f32.mrb[0].mxu0
      %v514 = vadd.f32 %v317, %v513
      %v515 = vpop.f32.mrb[0].mxu0
      %v516 = vadd.f32 %v317, %v515
      %v517 = vpop.f32.mrb[0].mxu0
      %v518 = vadd.f32 %v322, %v517
      %v519 = vpop.f32.mrb[0].mxu0
      %v520 = vadd.f32 %v322, %v519
      %521 = vmatprep.mubr.bf16.mxu0 0
      %522 = vmatmul.mubr.bf16.gmra.mrb[0].mxu0 %v452
      %v523 = vpop.f32.mrb[0].mxu0
      %v524 = vadd.f32 %v327, %v523
      %v525 = vpop.f32.mrb[0].mxu0
      %v526 = vadd.f32 %v327, %v525
      %v527 = vpop.f32.mrb[0].mxu0
      %v528 = vadd.f32 %v332, %v527
      %v529 = vpop.f32.mrb[0].mxu0
      %v530 = vadd.f32 %v332, %v529
      %531 = vmatprep.mubr.bf16.mxu0 0
      %532 = vmatmul.mubr.bf16.gmra.mrb[0].mxu0 %v455
      %v533 = vpop.f32.mrb[0].mxu0
      %v534 = vadd.f32 %v337, %v533
      %v535 = vpop.f32.mrb[0].mxu0
      %v536 = vadd.f32 %v337, %v535
      %v537 = vpop.f32.mrb[0].mxu0
      %v538 = vadd.f32 %v342, %v537
      %v539 = vpop.f32.mrb[0].mxu0
      %v540 = vadd.f32 %v342, %v539
      %541 = vmatprep.mubr.bf16.mxu0 0
      %542 = vmatmul.mubr.bf16.gmra.mrb[0].mxu0 %v458
      %v543 = vpop.f32.mrb[0].mxu0
      %v544 = vadd.f32 %v347, %v543
      %v545 = vpop.f32.mrb[0].mxu0
      %v546 = vadd.f32 %v347, %v545
      %v547 = vpop.f32.mrb[0].mxu0
      %v548 = vadd.f32 %v352, %v547
      %v549 = vpop.f32.mrb[0].mxu0
      %v550 = vadd.f32 %v352, %v549
      %551 = vmatprep.mubr.bf16.mxu0 0
      %552 = vmatmul.mubr.bf16.gmra.mrb[0].mxu0 %v461
      %v553 = vpop.f32.mrb[0].mxu0
      %v554 = vadd.f32 %v357, %v553
      %v555 = vpop.f32.mrb[0].mxu0
      %v556 = vadd.f32 %v357, %v555
      %v557 = vpop.f32.mrb[0].mxu0
      %v558 = vadd.f32 %v362, %v557
      %v559 = vpop.f32.mrb[0].mxu0
      %v560 = vadd.f32 %v362, %v559
      %561 = vmatprep.mubr.bf16.mxu0 0
      %562 = vmatmul.mubr.bf16.gmra.mrb[0].mxu0 %v464
      %v563 = vpop.f32.mrb[0].mxu0
      %v564 = vadd.f32 %v367, %v563
      %v565 = vpop.f32.mrb[0].mxu0
      %v566 = vadd.f32 %v367, %v565
      %v567 = vpop.f32.mrb[0].mxu0
      %v568 = vadd.f32 %v372, %v567
      %v569 = vpop.f32.mrb[0].mxu0
      %v570 = vadd.f32 %v372, %v569
      %571 = vmatprep.mubr.bf16.mxu0 0
      %572 = vmatmul.mubr.bf16.gmra.mrb[0].mxu0 %v467
      %v573 = vpop.f32.mrb[0].mxu0
      %v574 = vadd.f32 %v377, %v573
      %v575 = vpop.f32.mrb[0].mxu0
      %v576 = vadd.f32 %v377, %v575
      %v577 = vpop.f32.mrb[0].mxu0
      %v578 = vadd.f32 %v382, %v577
      %v579 = vpop.f32.mrb[0].mxu0
      %v580 = vadd.f32 %v382, %v579
      %581 = vdwg.mxu0
      %v582 = vmax.f32 %v504, 0.0
      %v583 = vmax.f32 %v506, 0.0
      %v584 = vmax.f32 %v508, 0.0
      %v585 = vmax.f32 %v510, 0.0
      %v586 = vmax.f32 %v514, 0.0
      %v587 = vmax.f32 %v516, 0.0
      %v588 = vmax.f32 %v518, 0.0
      %v589 = vmax.f32 %v520, 0.0
      %v590 = vmax.f32 %v524, 0.0
      %v591 = vmax.f32 %v526, 0.0
      %v592 = vmax.f32 %v528, 0.0
      %v593 = vmax.f32 %v530, 0.0
      %v594 = vmax.f32 %v534, 0.0
      %v595 = vmax.f32 %v536, 0.0
      %v596 = vmax.f32 %v538, 0.0
      %v597 = vmax.f32 %v540, 0.0
      %v598 = vmax.f32 %v544, 0.0
      %v599 = vmax.f32 %v546, 0.0
      %v600 = vmax.f32 %v548, 0.0
      %v601 = vmax.f32 %v550, 0.0
      %v602 = vmax.f32 %v554, 0.0
      %v603 = vmax.f32 %v556, 0.0
      %v604 = vmax.f32 %v558, 0.0
      %v605 = vmax.f32 %v560, 0.0
      %v606 = vmax.f32 %v564, 0.0
      %v607 = vmax.f32 %v566, 0.0
      %v608 = vmax.f32 %v568, 0.0
      %v609 = vmax.f32 %v570, 0.0
      %v610 = vmax.f32 %v574, 0.0
      %v611 = vmax.f32 %v576, 0.0
      %v612 = vmax.f32 %v578, 0.0
      %v613 = vmax.f32 %v580, 0.0
      %v614 = vadd.f32 %v256, %v582
      %v615 = vadd.f32 %v257, %v583
      %v616 = vadd.f32 %v258, %v584
      %v617 = vadd.f32 %v259, %v585
      %v618 = vadd.f32 %v260, %v586
      %v619 = vadd.f32 %v261, %v587
      %v620 = vadd.f32 %v262, %v588
      %v621 = vadd.f32 %v263, %v589
      %v622 = vadd.f32 %v264, %v590
      %v623 = vadd.f32 %v265, %v591
      %v624 = vadd.f32 %v266, %v592
      %v625 = vadd.f32 %v267, %v593
      %v626 = vadd.f32 %v268, %v594
      %v627 = vadd.f32 %v269, %v595
      %v628 = vadd.f32 %v270, %v596
      %v629 = vadd.f32 %v271, %v597
      %v630 = vadd.f32 %v272, %v598
      %v631 = vadd.f32 %v273, %v599
      %v632 = vadd.f32 %v274, %v600
      %v633 = vadd.f32 %v275, %v601
      %v634 = vadd.f32 %v276, %v602
      %v635 = vadd.f32 %v277, %v603
      %v636 = vadd.f32 %v278, %v604
      %v637 = vadd.f32 %v279, %v605
      %v638 = vadd.f32 %v280, %v606
      %v639 = vadd.f32 %v281, %v607
      %v640 = vadd.f32 %v282, %v608
      %v641 = vadd.f32 %v283, %v609
      %v642 = vadd.f32 %v284, %v610
      %v643 = vadd.f32 %v285, %v611
      %v644 = vadd.f32 %v286, %v612
      %v645 = vadd.f32 %v287, %v613
      %646 = vst [vmem:[#allocation2] sm:$0xff] %v614
      %647 = vst [vmem:[#allocation2 + $0x8] sm:$0xff] %v615
      %648 = vst [vmem:[#allocation2 + $0x10] sm:$0xff] %v616
      %649 = vst [vmem:[#allocation2 + $0x18] sm:$0xff] %v617
      %650 = vst [vmem:[#allocation2 + $0x20] sm:$0xff] %v618
      %651 = vst [vmem:[#allocation2 + $0x28] sm:$0xff] %v619
      %652 = vst [vmem:[#allocation2 + $0x30] sm:$0xff] %v620
      %653 = vst [vmem:[#allocation2 + $0x38] sm:$0xff] %v621
      %654 = vst [vmem:[#allocation2 + $0x40] sm:$0xff] %v622
      %655 = vst [vmem:[#allocation2 + $0x48] sm:$0xff] %v623
      %656 = vst [vmem:[#allocation2 + $0x50] sm:$0xff] %v624
      %657 = vst [vmem:[#allocation2 + $0x58] sm:$0xff] %v625
      %658 = vst [vmem:[#allocation2 + $0x60] sm:$0xff] %v626
      %659 = vst [vmem:[#allocation2 + $0x68] sm:$0xff] %v627
      %660 = vst [vmem:[#allocation2 + $0x70] sm:$0xff] %v628
      %661 = vst [vmem:[#allocation2 + $0x78] sm:$0xff] %v629
      %662 = vst [vmem:[#allocation2 + $0x80] sm:$0xff] %v630
      %663 = vst [vmem:[#allocation2 + $0x88] sm:$0xff] %v631
      %664 = vst [vmem:[#allocation2 + $0x90] sm:$0xff] %v632
      %665 = vst [vmem:[#allocation2 + $0x98] sm:$0xff] %v633
      %666 = vst [vmem:[#allocation2 + $0xa0] sm:$0xff] %v634
      %667 = vst [vmem:[#allocation2 + $0xa8] sm:$0xff] %v635
      %668 = vst [vmem:[#allocation2 + $0xb0] sm:$0xff] %v636
      %669 = vst [vmem:[#allocation2 + $0xb8] sm:$0xff] %v637
      %670 = vst [vmem:[#allocation2 + $0xc0] sm:$0xff] %v638
      %671 = vst [vmem:[#allocation2 + $0xc8] sm:$0xff] %v639
      %672 = vst [vmem:[#allocation2 + $0xd0] sm:$0xff] %v640
      %673 = vst [vmem:[#allocation2 + $0xd8] sm:$0xff] %v641
      %674 = vst [vmem:[#allocation2 + $0xe0] sm:$0xff] %v642
      %675 = vst [vmem:[#allocation2 + $0xe8] sm:$0xff] %v643
      %676 = vst [vmem:[#allocation2 + $0xf0] sm:$0xff] %v644
      %677 = vst [vmem:[#allocation2 + $0xf8] sm:$0xff] %v645
      // Predicated region
      $region37: #{tpu_custom_call.1} parent=31 // pred_check
        %p678 = pneg %p200
      $region38: #{tpu_custom_call.1} parent=31 // pred_check_branch
        %680 = sbr.rel (%p678) target = $region40
      $region39: #{tpu_custom_call.1} parent=31 // pred_region
        %v681 = vld [vmem:[#allocation2] sm:$0xff]
        %v682 = vld [vmem:[#allocation2 + $0x8] sm:$0xff]
        %v683 = vld [vmem:[#allocation2 + $0x10] sm:$0xff]
        %v684 = vld [vmem:[#allocation2 + $0x18] sm:$0xff]
        %v685 = vld [vmem:[#allocation2 + $0x20] sm:$0xff]
        %v686 = vld [vmem:[#allocation2 + $0x28] sm:$0xff]
        %v687 = vld [vmem:[#allocation2 + $0x30] sm:$0xff]
        %v688 = vld [vmem:[#allocation2 + $0x38] sm:$0xff]
        %v689 = vld [vmem:[#allocation2 + $0x40] sm:$0xff]
        %v690 = vld [vmem:[#allocation2 + $0x48] sm:$0xff]
        %v691 = vld [vmem:[#allocation2 + $0x50] sm:$0xff]
        %v692 = vld [vmem:[#allocation2 + $0x58] sm:$0xff]
        %v693 = vld [vmem:[#allocation2 + $0x60] sm:$0xff]
        %v694 = vld [vmem:[#allocation2 + $0x68] sm:$0xff]
        %v695 = vld [vmem:[#allocation2 + $0x70] sm:$0xff]
        %v696 = vld [vmem:[#allocation2 + $0x78] sm:$0xff]
        %v697 = vld [vmem:[#allocation2 + $0x80] sm:$0xff]
        %v698 = vld [vmem:[#allocation2 + $0x88] sm:$0xff]
        %v699 = vld [vmem:[#allocation2 + $0x90] sm:$0xff]
        %v700 = vld [vmem:[#allocation2 + $0x98] sm:$0xff]
        %v701 = vld [vmem:[#allocation2 + $0xa0] sm:$0xff]
        %v702 = vld [vmem:[#allocation2 + $0xa8] sm:$0xff]
        %v703 = vld [vmem:[#allocation2 + $0xb0] sm:$0xff]
        %v704 = vld [vmem:[#allocation2 + $0xb8] sm:$0xff]
        %v705 = vld [vmem:[#allocation2 + $0xc0] sm:$0xff]
        %v706 = vld [vmem:[#allocation2 + $0xc8] sm:$0xff]
        %v707 = vld [vmem:[#allocation2 + $0xd0] sm:$0xff]
        %v708 = vld [vmem:[#allocation2 + $0xd8] sm:$0xff]
        %v709 = vld [vmem:[#allocation2 + $0xe0] sm:$0xff]
        %v710 = vld [vmem:[#allocation2 + $0xe8] sm:$0xff]
        %v711 = vld [vmem:[#allocation2 + $0xf0] sm:$0xff]
        %v712 = vld [vmem:[#allocation2 + $0xf8] sm:$0xff]
        %v713 = vadd.f32 %v681, %v682
        %714 = vadd.xlane.f32.xlu0 %v713
        %v715 = vpop.xlane.xlu0 %714
        %v716 = vadd.f32 %v683, %v684
        %717 = vadd.xlane.f32.xlu0 %v716
        %v718 = vpop.xlane.xlu0 %717
        %v719 = vadd.f32 %v685, %v686
        %720 = vadd.xlane.f32.xlu0 %v719
        %v721 = vpop.xlane.xlu0 %720
        %v722 = vadd.f32 %v687, %v688
        %723 = vadd.xlane.f32.xlu0 %v722
        %v724 = vpop.xlane.xlu0 %723
        %v725 = vadd.f32 %v689, %v690
        %726 = vadd.xlane.f32.xlu0 %v725
        %v727 = vpop.xlane.xlu0 %726
        %v728 = vadd.f32 %v691, %v692
        %729 = vadd.xlane.f32.xlu0 %v728
        %v730 = vpop.xlane.xlu0 %729
        %v731 = vadd.f32 %v693, %v694
        %732 = vadd.xlane.f32.xlu0 %v731
        %v733 = vpop.xlane.xlu0 %732
        %v734 = vadd.f32 %v695, %v696
        %735 = vadd.xlane.f32.xlu0 %v734
        %v736 = vpop.xlane.xlu0 %735
        %v737 = vadd.f32 %v697, %v698
        %738 = vadd.xlane.f32.xlu0 %v737
        %v739 = vpop.xlane.xlu0 %738
        %v740 = vadd.f32 %v699, %v700
        %741 = vadd.xlane.f32.xlu0 %v740
        %v742 = vpop.xlane.xlu0 %741
        %v743 = vadd.f32 %v701, %v702
        %744 = vadd.xlane.f32.xlu0 %v743
        %v745 = vpop.xlane.xlu0 %744
        %v746 = vadd.f32 %v703, %v704
        %747 = vadd.xlane.f32.xlu0 %v746
        %v748 = vpop.xlane.xlu0 %747
        %v749 = vadd.f32 %v705, %v706
        %750 = vadd.xlane.f32.xlu0 %v749
        %v751 = vpop.xlane.xlu0 %750
        %v752 = vadd.f32 %v707, %v708
        %753 = vadd.xlane.f32.xlu0 %v752
        %v754 = vpop.xlane.xlu0 %753
        %v755 = vadd.f32 %v709, %v710
        %756 = vadd.xlane.f32.xlu0 %v755
        %v757 = vpop.xlane.xlu0 %756
        %v758 = vadd.f32 %v711, %v712
        %759 = vadd.xlane.f32.xlu0 %v758
        %v760 = vpop.xlane.xlu0 %759
        %vm761 = vcmask 7168
        %762 = vst.msk [vmem:[%s198] sm:$0xff] %vm761, %v715
        %763 = vst.msk [vmem:[%s198 + $0x8] sm:$0xff] %vm761, %v718
        %764 = vst.msk [vmem:[%s198 + $0x10] sm:$0xff] %vm761, %v721
        %765 = vst.msk [vmem:[%s198 + $0x18] sm:$0xff] %vm761, %v724
        %766 = vst.msk [vmem:[%s198 + $0x20] sm:$0xff] %vm761, %v727
        %767 = vst.msk [vmem:[%s198 + $0x28] sm:$0xff] %vm761, %v730
        %768 = vst.msk [vmem:[%s198 + $0x30] sm:$0xff] %vm761, %v733
        %769 = vst.msk [vmem:[%s198 + $0x38] sm:$0xff] %vm761, %v736
        %770 = vst.msk [vmem:[%s198 + $0x40] sm:$0xff] %vm761, %v739
        %771 = vst.msk [vmem:[%s198 + $0x48] sm:$0xff] %vm761, %v742
        %772 = vst.msk [vmem:[%s198 + $0x50] sm:$0xff] %vm761, %v745
        %773 = vst.msk [vmem:[%s198 + $0x58] sm:$0xff] %vm761, %v748
        %774 = vst.msk [vmem:[%s198 + $0x60] sm:$0xff] %vm761, %v751
        %775 = vst.msk [vmem:[%s198 + $0x68] sm:$0xff] %vm761, %v754
        %776 = vst.msk [vmem:[%s198 + $0x70] sm:$0xff] %vm761, %v757
        %777 = vst.msk [vmem:[%s198 + $0x78] sm:$0xff] %vm761, %v760
      $region40: #{tpu_custom_call.1} parent=31 // pred_fallthru
        _
      %p778 = scmp.lt.s32.totalorder %s18, 1
      %s779 = scalar_select %p778, %s18, 1
      %s780 = smul.addr %s779, 16
      %s781 = smul.addr %s780, 8
      %s782 = scalar_lea.vmem %s3, %s781
      // Predicated region
      $region41: #{tpu_custom_call.1} parent=31 // pred_check
        %p783 = pneg %p114
      $region42: #{tpu_custom_call.1} parent=31 // pred_check_branch
        %785 = sbr.rel (%p783) target = $region44
      $region43: #{tpu_custom_call.1} parent=31 // pred_region
        _
      $region44: #{tpu_custom_call.1} parent=31 // pred_fallthru
        _
    $region32: #{tpu_custom_call.1} parent=5 // pred_fallthru
      _
    %p786 = scmp.le.s32.totalorder 2, %s9
    // Predicated region
    $region45: #{tpu_custom_call.1} parent=5 // pred_check
      %p787 = pneg %p786
    $region46: #{tpu_custom_call.1} parent=5 // pred_check_branch
      %789 = sbr.rel (%p787) target = $region48
    $region47: #{tpu_custom_call.1} parent=5 // pred_region
      %s790 = ssub.s32 %s9, 2
      // Predicated region
      $region49: #{tpu_custom_call.1} parent=47 // pred_check
        %p791 = pneg %p120
      $region50: #{tpu_custom_call.1} parent=47 // pred_check_branch
        %793 = sbr.rel (%p791) target = $region52
      $region51: #{tpu_custom_call.1} parent=47 // pred_region
        %p794 = scmp.lt.s32.totalorder %s20, 1
        %s795 = scalar_select %p794, %s20, 1
        %s796 = smul.addr %s795, 16
        %s797 = smul.addr %s796, 8
        %s798 = scalar_lea.vmem %s3, %s797
      $region52: #{tpu_custom_call.1} parent=47 // pred_fallthru
        _
    $region48: #{tpu_custom_call.1} parent=5 // pred_fallthru
      _
  $region6: #{tpu_custom_call.1} parent=0 // loop_footer
    %s13 = sadd.s32 1, %s9
  $region7: #{tpu_custom_call.1} parent=0 // loop_footer_branch
    %8 = sbr.rel target = $region3
  $region8: #{tpu_custom_call.1} parent=0 // loop_exit
    _

</llo_original>
